<compile_context>
chip_gen: v5e
topology: v5e:2x2
jax: 0.10.0
libtpu: 0.0.40
codegen_flags: <defaults>
</compile_context>

<pallas_src>
import jax
import jax.numpy as jnp
from jax.experimental import pallas as pl
from jax.experimental.pallas import tpu as pltpu


def _round_up(x, m):
    return ((x + m - 1) // m) * m


def bottleneck_kernel(x_ref, w1_ref, b1_ref, w2_ref, b2_ref, o_ref):
    """One (TB, C) batch tile: sigmoid( relu(x @ W1 + b1) @ W2 + b2 + x )."""
    x = x_ref[...]
    # l1: (TB, C) @ (C, mid) -> (TB, mid); f32 accumulation on the MXU.
    h = jnp.dot(x, w1_ref[...], preferred_element_type=jnp.float32)
    h = jnp.maximum(h + b1_ref[...], 0.0)                      # bias + ReLU (f32)
    # l2: (TB, mid) @ (mid, C) -> (TB, C); feed MXU in the weight dtype.
    y = jnp.dot(h.astype(w2_ref.dtype), w2_ref[...],
                preferred_element_type=jnp.float32)
    y = y + b2_ref[...] + x.astype(jnp.float32)                # bias + residual (f32)
    o_ref[...] = jax.nn.sigmoid(y).astype(o_ref.dtype)         # exp/recip on EUP


def _choose_block_batch(batch, channels, itemsize,
                        budget_bytes=16 * 1024 * 1024):
    """Largest batch tile (multiple of 8, <=1024 rows) fitting a conservative
    VMEM budget: 2 double-buffered tiles (input + output) per grid step."""
    per_row = 4 * channels * itemsize
    tb = budget_bytes // max(per_row, 1)
    tb = max(8, min(int(tb), 1024))
    tb = min(tb, _round_up(batch, 8))
    return _round_up(tb, 8)


def bottleneck_forward(x, w1_t, b1, w2_t, b2, *, block_batch=None,
                       vmem_limit_bytes=64 * 1024 * 1024):
    """
    x:    (..., C)   activations (f32 or bf16), Linear applied on last dim
    w1_t: (C, mid)   l1 weight, pre-transposed from PyTorch's (mid, C)
    b1:   (mid,)     l1 bias
    w2_t: (mid, C)   l2 weight, pre-transposed from PyTorch's (C, mid)
    b2:   (C,)       l2 bias
    """
    orig_shape = x.shape
    C = orig_shape[-1]
    mid = w1_t.shape[1]

    x2 = x.reshape(-1, C)
    B = x2.shape[0]

    TB = int(block_batch) if block_batch else _choose_block_batch(
        B, C, x2.dtype.itemsize)
    B_pad = _round_up(B, TB)
    if B_pad != B:
        x2 = jnp.pad(x2, ((0, B_pad - B), (0, 0)))

    b1_r = b1.reshape(1, mid).astype(jnp.float32)
    b2_r = b2.reshape(1, C).astype(jnp.float32)

    out = pl.pallas_call(
        bottleneck_kernel,
        out_shape=jax.ShapeDtypeStruct((B_pad, C), x.dtype),
        grid=(B_pad // TB,),
        in_specs=[
            pl.BlockSpec((TB, C), lambda i: (i, 0)),    # activations: pipelined
            pl.BlockSpec((C, mid), lambda i: (0, 0)),   # W1: resident in VMEM
            pl.BlockSpec((1, mid), lambda i: (0, 0)),   # b1: resident
            pl.BlockSpec((mid, C), lambda i: (0, 0)),   # W2: resident
            pl.BlockSpec((1, C), lambda i: (0, 0)),     # b2: resident
        ],
        out_specs=pl.BlockSpec((TB, C), lambda i: (i, 0)),
        compiler_params=pltpu.CompilerParams(
            dimension_semantics=("parallel",),          # megacore-shardable on v7x
            vmem_limit_bytes=vmem_limit_bytes,
        ),
    )(x2, w1_t, b1_r, w2_t, b2_r)

    if B_pad != B:
        out = out[:B]
    return out.reshape(orig_shape)


def init_params(key, channels, reduction_ratio):
    """nn.Linear-style init in PyTorch layout: W1 (mid, C), W2 (C, mid)."""
    mid = int(channels / float(reduction_ratio))
    k1, k2, k3, k4 = jax.random.split(key, 4)
    bound1 = 1.0 / jnp.sqrt(channels)
    bound2 = 1.0 / jnp.sqrt(mid)
    w1 = jax.random.uniform(k1, (mid, channels), jnp.float32, -bound1, bound1)
    b1 = jax.random.uniform(k2, (mid,), jnp.float32, -bound1, bound1)
    w2 = jax.random.uniform(k3, (channels, mid), jnp.float32, -bound2, bound2)
    b2 = jax.random.uniform(k4, (channels,), jnp.float32, -bound2, bound2)
    return w1, b1, w2, b2


def prepare_params(w1, b1, w2, b2, dtype=jnp.float32):
    """One-time re-layout (and optional narrowing) of the weights so the kernel
    does plain row-major matmuls -- removes the per-forward transpose ops."""
    return (jnp.transpose(w1).astype(dtype),   # (C, mid)
            b1.astype(jnp.float32),
            jnp.transpose(w2).astype(dtype),   # (mid, C)
            b2.astype(jnp.float32))


def reference_forward(x, w1, b1, w2, b2):
    h = jnp.maximum(x @ w1.T + b1, 0.0)
    y = h @ w2.T + b2 + x
    return jax.nn.sigmoid(y)


if __name__ == "__main__":
    channels = 32
    reduction_ratio = 4
    batch = 8

    key = jax.random.PRNGKey(0)
    kx, kp = jax.random.split(key)
    x = jax.random.normal(kx, (batch, channels), jnp.float32)
    w1, b1, w2, b2 = init_params(kp, channels, reduction_ratio)
    ref = reference_forward(x, w1, b1, w2, b2)

    # f32 path (tight tolerance).
    p32 = prepare_params(w1, b1, w2, b2, jnp.float32)
    out = jax.block_until_ready(bottleneck_forward(x, *p32))
    assert out.shape == (batch, channels)
    assert jnp.allclose(out, ref, atol=1e-5, rtol=1e-5)

    # bf16 I/O path (halves HBM traffic for x / weights; f32 accumulation).
    pbf = prepare_params(w1, b1, w2, b2, jnp.bfloat16)
    out_bf = jax.block_until_ready(bottleneck_forward(x.astype(jnp.bfloat16), *pbf))
    assert out_bf.shape == (batch, channels)
    assert jnp.allclose(out_bf.astype(jnp.float32), ref, atol=2e-2, rtol=2e-2)

    # Ragged batch (B not divisible by the tile) exercises the pad+slice path.
    xb = jax.random.normal(kx, (batch + 5, channels), jnp.float32)
    refb = reference_forward(xb, w1, b1, w2, b2)
    outb = jax.block_until_ready(bottleneck_forward(xb, *p32, block_batch=8))
    assert outb.shape == xb.shape
    assert jnp.allclose(outb, refb, atol=1e-5, rtol=1e-5)

    print("KERNEL_OK")
</pallas_src>

<mosaic_0001>
module attributes {stable_mosaic.version = 11 : i64} {
  func.func @bottleneck_kernel(%arg0: i32, %arg1: memref<8x32xf32, #tpu.memory_space<vmem>>, %arg2: memref<32x8xf32, #tpu.memory_space<vmem>>, %arg3: memref<1x8xf32, #tpu.memory_space<vmem>>, %arg4: memref<8x32xf32, #tpu.memory_space<vmem>>, %arg5: memref<1x32xf32, #tpu.memory_space<vmem>>, %arg6: memref<8x32xf32, #tpu.memory_space<vmem>>) attributes {dimension_semantics = [#tpu.dimension_semantics<parallel>], iteration_bounds = array<i64: 1>, scalar_prefetch = 0 : i64, scratch_operands = 0 : i64, tpu.core_type = #tpu.core_type<tc>, window_params = [{transform_indices = @transform_0, window_bounds = array<i64: 8, 32>}, {pipeline_mode = #tpu.pipeline_mode<synchronous>, transform_indices = @transform_1, window_bounds = array<i64: 32, 8>}, {pipeline_mode = #tpu.pipeline_mode<synchronous>, transform_indices = @transform_2, window_bounds = array<i64: 1, 8>}, {pipeline_mode = #tpu.pipeline_mode<synchronous>, transform_indices = @transform_3, window_bounds = array<i64: 8, 32>}, {pipeline_mode = #tpu.pipeline_mode<synchronous>, transform_indices = @transform_4, window_bounds = array<i64: 1, 32>}, {transform_indices = @transform_5, window_bounds = array<i64: 8, 32>}]} {
    %c0 = arith.constant 0 : index
    %c0_0 = arith.constant 0 : index
    %0 = vector.load %arg1[%c0, %c0_0] : memref<8x32xf32, #tpu.memory_space<vmem>>, vector<8x32xf32>
    %c0_1 = arith.constant 0 : index
    %c0_2 = arith.constant 0 : index
    %1 = vector.load %arg2[%c0_1, %c0_2] : memref<32x8xf32, #tpu.memory_space<vmem>>, vector<32x8xf32>
    %cst = arith.constant dense<0.000000e+00> : vector<8x8xf32>
    %2 = tpu.matmul %0, %1, %cst {dimension_numbers = #tpu.dot_dimension_numbers<[1], [0], [0], [1], [0, 0, 1, 1], [], []>} : vector<8x32xf32>, vector<32x8xf32>, vector<8x8xf32> -> vector<8x8xf32>
    %c0_3 = arith.constant 0 : index
    %c0_4 = arith.constant 0 : index
    %3 = vector.load %arg3[%c0_3, %c0_4] : memref<1x8xf32, #tpu.memory_space<vmem>>, vector<1x8xf32>
    %4 = vector.broadcast %3 : vector<1x8xf32> to vector<8x8xf32>
    %5 = arith.addf %2, %4 : vector<8x8xf32>
    %cst_5 = arith.constant 0.000000e+00 : f32
    %6 = vector.broadcast %cst_5 : f32 to vector<8x8xf32>
    %7 = arith.maximumf %5, %6 : vector<8x8xf32>
    %c0_6 = arith.constant 0 : index
    %c0_7 = arith.constant 0 : index
    %8 = vector.load %arg4[%c0_6, %c0_7] : memref<8x32xf32, #tpu.memory_space<vmem>>, vector<8x32xf32>
    %cst_8 = arith.constant dense<0.000000e+00> : vector<8x32xf32>
    %9 = tpu.matmul %7, %8, %cst_8 {dimension_numbers = #tpu.dot_dimension_numbers<[1], [0], [0], [1], [0, 0, 1, 1], [], []>} : vector<8x8xf32>, vector<8x32xf32>, vector<8x32xf32> -> vector<8x32xf32>
    %c0_9 = arith.constant 0 : index
    %c0_10 = arith.constant 0 : index
    %10 = vector.load %arg5[%c0_9, %c0_10] : memref<1x32xf32, #tpu.memory_space<vmem>>, vector<1x32xf32>
    %11 = vector.broadcast %10 : vector<1x32xf32> to vector<8x32xf32>
    %12 = arith.addf %9, %11 : vector<8x32xf32>
    %13 = arith.addf %12, %0 : vector<8x32xf32>
    %14 = arith.negf %13 : vector<8x32xf32>
    %15 = math.exp %14 : vector<8x32xf32>
    %cst_11 = arith.constant 1.000000e+00 : f32
    %16 = vector.broadcast %cst_11 : f32 to vector<8x32xf32>
    %17 = arith.addf %16, %15 : vector<8x32xf32>
    %18 = arith.divf %16, %17 : vector<8x32xf32>
    %c0_12 = arith.constant 0 : index
    %c0_13 = arith.constant 0 : index
    %19 = vector.load %arg6[%c0_12, %c0_13] : memref<8x32xf32, #tpu.memory_space<vmem>>, vector<8x32xf32>
    tpu.vector_store %arg6[%c0_12, %c0_13], %18 {strides = array<i32>} : memref<8x32xf32, #tpu.memory_space<vmem>>, vector<8x32xf32>,
    return
  }
  func.func @transform_0(%arg0: i32) -> (i32, i32) {
    %c0_i32 = arith.constant 0 : i32
    %c0_i32_0 = arith.constant 0 : i32
    return %arg0, %c0_i32 : i32, i32
  }
  func.func @transform_1(%arg0: i32) -> (i32, i32) {
    %c0_i32 = arith.constant 0 : i32
    %c0_i32_0 = arith.constant 0 : i32
    %c0_i32_1 = arith.constant 0 : i32
    return %c0_i32, %c0_i32_0 : i32, i32
  }
  func.func @transform_2(%arg0: i32) -> (i32, i32) {
    %c0_i32 = arith.constant 0 : i32
    %c0_i32_0 = arith.constant 0 : i32
    %c0_i32_1 = arith.constant 0 : i32
    return %c0_i32, %c0_i32_0 : i32, i32
  }
  func.func @transform_3(%arg0: i32) -> (i32, i32) {
    %c0_i32 = arith.constant 0 : i32
    %c0_i32_0 = arith.constant 0 : i32
    %c0_i32_1 = arith.constant 0 : i32
    return %c0_i32, %c0_i32_0 : i32, i32
  }
  func.func @transform_4(%arg0: i32) -> (i32, i32) {
    %c0_i32 = arith.constant 0 : i32
    %c0_i32_0 = arith.constant 0 : i32
    %c0_i32_1 = arith.constant 0 : i32
    return %c0_i32, %c0_i32_0 : i32, i32
  }
  func.func @transform_5(%arg0: i32) -> (i32, i32) {
    %c0_i32 = arith.constant 0 : i32
    %c0_i32_0 = arith.constant 0 : i32
    return %arg0, %c0_i32 : i32, i32
  }
}

</mosaic_0001>

<llo_original>
// kernel: tpu_custom_call.1
$region0: #{tpu_custom_call.1}
  #allocation0 [shape = 'u32[]', space=smem, size = 0x4, offset = 0x4, fixed_abs, tag = 'smem constant byte address 0x4 - core index']
  #allocation1 [shape = 'u32[72,128]{1,0:T(1,128)}', space=vmem, size = 0x9000, scoped, tag = 'internal scratch']
  %s0 = inlined_call_operand.vmem [shape: f32[8,32], index: 0, kind: input, shape index: {}]
  %s1 = inlined_call_operand.vmem [shape: f32[32,8], index: 1, kind: input, shape index: {}]
  %s2 = inlined_call_operand.vmem [shape: f32[1,8], index: 2, kind: input, shape index: {}]
  %s3 = inlined_call_operand.vmem [shape: f32[8,32], index: 3, kind: input, shape index: {}]
  %s4 = inlined_call_operand.vmem [shape: f32[1,32], index: 4, kind: input, shape index: {}]
  %s5 = inlined_call_operand.hbm [shape: f32[8,32], index: 5, kind: output, shape index: {}]
  %s6 = sld [smem:[#allocation0]]
  $region30: #{tpu_custom_call.1} parent=0
    _
  %s8 = ssub.s32 1, %s6
  %s9 = scalar_select 0, %s8, %s6
  $region1: #{tpu_custom_call.1} parent=0
    #allocation2 [shape = 'u8[4096]{0}', space=vmem, size = 0x1000, scoped, tag = 'output window, operand 0, single buffered']
    #allocation3 [shape = 's32[1]{0}', space=sflag, size = 0x4, scoped, tag = 'scoped memory for tpu_custom_call.1']
    %10 = vsyncpa [#allocation3], 0
    // Predicated region
    $region2: #{tpu_custom_call.1} parent=1 // pred_check
      _
    $region3: #{tpu_custom_call.1} parent=1 // pred_check_branch
      %12 = sbr.rel (0) target = $region5
    $region4: #{tpu_custom_call.1} parent=1 // pred_region
      _
    $region5: #{tpu_custom_call.1} parent=1 // pred_fallthru
      _
    // Predicated region
    $region6: #{tpu_custom_call.1} parent=1 // pred_check
      _
    $region7: #{tpu_custom_call.1} parent=1 // pred_check_branch
      %14 = sbr.rel (0) target = $region9
    $region8: #{tpu_custom_call.1} parent=1 // pred_region
      _
    $region9: #{tpu_custom_call.1} parent=1 // pred_fallthru
      _
    // Predicated region
    $region10: #{tpu_custom_call.1} parent=1 // pred_check
      _
    $region11: #{tpu_custom_call.1} parent=1 // pred_check_branch
      %16 = sbr.rel (0) target = $region13
    $region12: #{tpu_custom_call.1} parent=1 // pred_region
      _
    $region13: #{tpu_custom_call.1} parent=1 // pred_fallthru
      _
    // Predicated region
    $region14: #{tpu_custom_call.1} parent=1 // pred_check
      _
    $region15: #{tpu_custom_call.1} parent=1 // pred_check_branch
      %18 = sbr.rel (0) target = $region17
    $region16: #{tpu_custom_call.1} parent=1 // pred_region
      _
    $region17: #{tpu_custom_call.1} parent=1 // pred_fallthru
      _
    // Predicated region
    $region18: #{tpu_custom_call.1} parent=1 // pred_check
      _
    $region19: #{tpu_custom_call.1} parent=1 // pred_check_branch
      %20 = sbr.rel (0) target = $region21
    $region20: #{tpu_custom_call.1} parent=1 // pred_region
      _
    $region21: #{tpu_custom_call.1} parent=1 // pred_fallthru
      _
    %v21 = vld [vmem:[%s0] sm:$0xff]
    %v22 = vld [vmem:[%s1] sm:$0xff]
    %v23 = vld [vmem:[%s1 + $0x8] sm:$0xff]
    %v24 = vld [vmem:[%s1 + $0x10] sm:$0xff]
    %v25 = vld [vmem:[%s1 + $0x18] sm:$0xff]
    %v26 = vld [vmem:[%s2] sm:$0x1]
    %v28 = vperm.slane %v26, 0
    %vm30 = vcmask 261120
    %v32 = vsel %vm30, %v21, 0
    %34 = vmatpush.msra.mxu0 0.0
    %35 = vmatpush.msra.mxu0 0.0
    %36 = vmatpush.msra.mxu0 0.0
    %37 = vmatpush.msra.mxu0 0.0
    %38 = vmatpush.msra.mxu0 0.0
    %39 = vmatpush.msra.mxu0 0.0
    %40 = vmatpush.msra.mxu0 0.0
    %41 = vmatpush.msra.mxu0 0.0
    %42 = vmatpush.msra.mxu0 0.0
    %43 = vmatpush.msra.mxu0 0.0
    %44 = vmatpush.msra.mxu0 0.0
    %45 = vmatpush.msra.mxu0 0.0
    %46 = vmatpush.msra.mxu0 %v25
    %47 = vmatpush.msra.mxu0 %v24
    %48 = vmatpush.msra.mxu0 %v23
    %49 = vmatpush.msra.mxu0 %v22
    %50 = vmatmul.f32.gmra.mxu0 %v32
    %v51 = vpop.f32.mrf.mxu0
    %v52 = vadd.f32 %v28, %v51
    %53 = vdwg.mxu0
    %v54 = vmax.f32 %v52, 0.0
    %v55 = vld [vmem:[%s3] sm:$0xff]
    %v56 = vld [vmem:[%s4] sm:$0x1]
    %v58 = vperm.slane %v56, 0
    %vm60 = vcmask 64512
    %v62 = vsel %vm60, %v54, 0
    %64 = vmatpush.msra.mxu0 0.0
    %65 = vmatpush.msra.mxu0 0.0
    %66 = vmatpush.msra.mxu0 0.0
    %67 = vmatpush.msra.mxu0 0.0
    %68 = vmatpush.msra.mxu0 0.0
    %69 = vmatpush.msra.mxu0 0.0
    %70 = vmatpush.msra.mxu0 0.0
    %71 = vmatpush.msra.mxu0 0.0
    %72 = vmatpush.msra.mxu0 0.0
    %73 = vmatpush.msra.mxu0 0.0
    %74 = vmatpush.msra.mxu0 0.0
    %75 = vmatpush.msra.mxu0 0.0
    %76 = vmatpush.msra.mxu0 0.0
    %77 = vmatpush.msra.mxu0 0.0
    %78 = vmatpush.msra.mxu0 0.0
    %79 = vmatpush.msra.mxu0 %v55
    %80 = vmatmul.f32.gmra.mxu0 %v62
    %v81 = vpop.f32.mrf.mxu0
    %v82 = vadd.f32 %v58, %v81
    %83 = vdwg.mxu0
    %v84 = vadd.f32 %v82, %v21
    %v85 = vxor.u32 %v84, 2147483648
    %v86 = vmul.f32 %v85, 1.442695
    %v87 = vpow.pop %v86
    %v88 = vadd.f32 %v87, 1.0
    %v89 = vrcp.pop %v88
    %v90 = vmul.f32 %v88, %v89
    %v91 = vsub.f32 1.0, %v90
    %v92 = vmul.f32 %v89, %v91
    %v93 = vadd.f32 %v89, %v92
    %vm94 = vweird.f32 %v88
    %vm95 = vweird.f32 %v89
    %vm96 = vmor %vm94, %vm95
    %v97 = vsel %vm96, %v89, %v93
    %v98 = vand.u32 2147483647, %v88
    %vm99 = vcmp.eq.f32.partialorder %v98, 8.507059e+37
    %v100 = vand.u32 %v88, 2147483648
    %v101 = vor.u32 1.1754944e-38, %v100
    %v102 = vsel %vm99, %v101, %v97
    %v103 = vmul.f32 1.0, %v102
    %104 = vst.msk [vmem:[#allocation2] sm:$0xff] %vm30, %v103
    // Predicated region
    $region22: #{tpu_custom_call.1} parent=1 // pred_check
      _
    $region23: #{tpu_custom_call.1} parent=1 // pred_check_branch
      %106 = sbr.rel (0) target = $region25
    $region24: #{tpu_custom_call.1} parent=1 // pred_region
      %108 = vsyncadd [#allocation3], 0
      %s110 = sshll.u32 [#allocation2], 4
      %s111 = int_to_ptr.vmem [resolvable:$true] %s110
      %s112 = sshll.u32 %s5, 4
      %s113 = int_to_ptr.hbm [resolvable:$true] %s112
      %115 = dma.vmem_to_hbm [thread:$0]  %s111, 128, %s113, [#allocation3]
    $region25: #{tpu_custom_call.1} parent=1 // pred_fallthru
      _
    // Predicated region
    $region26: #{tpu_custom_call.1} parent=1 // pred_check
      _
    $region27: #{tpu_custom_call.1} parent=1 // pred_check_branch
      %117 = sbr.rel (0) target = $region29
    $region28: #{tpu_custom_call.1} parent=1 // pred_region
      %119 = dma.done [#allocation3], 128
    $region29: #{tpu_custom_call.1} parent=1 // pred_fallthru
      _
    %120 = vsyncpa [#allocation3], 1

</llo_original>
